<compile_context>
chip_gen: v7x
topology: tpu7x:2x2x1
jax: 0.10.0
libtpu: 0.0.40
codegen_flags: <defaults>
</compile_context>

<pallas_src>
import functools

import jax
import jax.numpy as jnp
import numpy as np
from jax.experimental import pallas as pl
from jax.experimental.pallas import tpu as pltpu

# Static sizes implied by the PyTorch module (fc1 in-features 784 = 16 * 49).
C = 2                 # input channels
L = 99                # input length
K = 2                 # conv kernel size
OC = 16               # conv output channels
LC = L - K + 1        # 98  conv output length
LP = LC // 2          # 49  pooled length
H = 200               # fc hidden units
LANE = 128
XW = 256              # zero-padded input length presented to the kernel
CONVW = 160           # conv columns computed in-kernel (>= LC + 1 and >= 129)
FLAT = (OC // 2) * LANE   # 1024 lane-padded flattened features (OC-pair packed)
HP = 256              # lane-padded hidden width
OP = 128              # lane-padded logits width


def cnn_fused_kernel(x_ref, wcb_ref, w1_hbm, b1_ref, w2_ref, b2_ref,
                     w3_ref, b3_ref, out_ref, flat_ref, w1_vmem, w1_sem):
    # Kick off the fc1-weight DMA immediately; it overlaps conv/pool/flatten.
    w1_cp = pltpu.make_async_copy(w1_hbm, w1_vmem, w1_sem)
    w1_cp.start()

    # ---- Conv1d(2,16,2) + bias + ReLU via a dual-alignment im2col matmul ----
    # x is left-padded by one zero, so xv[:, j+1] == x[:, j].
    #   rows 0..3 (alignment A): lane j holds x[:, j] / x[:, j+1]  -> conv value j at lane j
    #   rows 4..7 (alignment B): lane j holds x[:, j-1] / x[:, j]  -> conv value j-1 at lane j
    #   row  8   : ones (bias, folded into the matmul)
    # wcb routes even OCs to alignment A and odd OCs to alignment B, so odd-OC
    # conv outputs land pre-shifted by +1 lane (no pltpu.roll / relayout needed).
    xv = x_ref[0]                                                  # (2, 256) f32
    cols = jnp.concatenate(
        [xv[0:1, 1:CONVW + 1], xv[0:1, 2:CONVW + 2],
         xv[1:2, 1:CONVW + 1], xv[1:2, 2:CONVW + 2],
         xv[0:1, 0:CONVW],     xv[0:1, 1:CONVW + 1],
         xv[1:2, 0:CONVW],     xv[1:2, 1:CONVW + 1],
         jnp.ones((1, CONVW), jnp.float32)],
        axis=0).astype(jnp.bfloat16)                               # (9, 160)
    conv = jnp.dot(wcb_ref[...], cols,
                   preferred_element_type=jnp.float32)             # (16, 160) f32
    conv = jnp.maximum(conv, 0.0)                                   # ReLU

    # ---- MaxPool1d(2): pairwise max of adjacent lanes ----
    # rows 0..7  (even OCs 0,2,..,14): pooled value p lands on lane 2p
    # rows 8..15 (odd  OCs 1,3,..,15): pooled value p lands on lane 2p+1
    # Junk lanes stay finite (zero padding + ReLU) and hit zeroed fc1 rows.
    pooled = jnp.maximum(conv[:, 0:LANE], conv[:, 1:LANE + 1])      # (16, 128)

    # ---- OC-pair lane packing: (16,128) -> (8,128); halves fc1 weight bytes ----
    lane = jax.lax.broadcasted_iota(jnp.int32, (OC // 2, LANE), 1)
    packed = jnp.where((lane & 1) == 1,
                       pooled[OC // 2:OC, :],        # odd OCs  -> odd lanes
                       pooled[0:OC // 2, :]          # even OCs -> even lanes
                       ).astype(jnp.bfloat16)

    # ---- flatten(start_dim=0): 8 lane-aligned (1,128) stores into bf16 scratch ----
    for a in range(OC // 2):
        flat_ref[:, a * LANE:(a + 1) * LANE] = packed[a:a + 1, :]
    flat = flat_ref[...]                                            # (1, 1024) bf16

    # ---- FC stack: bf16 matmul operands, f32 accumulation, f32 elementwise ----
    # TODO(synk): Dropout(p=0.2) is identity in eval/inference mode; not applied.
    w1_cp.wait()                                                    # fc1 weights resident
    h1 = jnp.dot(flat, w1_vmem[...],
                 preferred_element_type=jnp.float32) + b1_ref[...]
    h1 = jnp.maximum(h1, 0.0)
    h2 = jnp.dot(h1.astype(jnp.bfloat16), w2_ref[...],
                 preferred_element_type=jnp.float32) + b2_ref[...]
    h2 = jnp.maximum(h2, 0.0)
    out_ref[...] = jnp.dot(h2.astype(jnp.bfloat16), w3_ref[...],
                           preferred_element_type=jnp.float32) + b3_ref[...]


def prepare_params(params, classes):
    """One-time repack of PyTorch-layout params into the kernel layout.

    conv weight (16,2,2) + bias (16,) -> (16, 9) bf16 block matrix:
        rows 0..7  = even OCs, weights in cols 0..3 (alignment A), bias in col 8
        rows 8..15 = odd  OCs, weights in cols 4..7 (alignment B), bias in col 8
    fc1 (200,784) -> (1024, 256) bf16 (OC-pair packed):
        row a*128 + 2p   = fc1.weight[:, (2a)*49   + p]
        row a*128 + 2p+1 = fc1.weight[:, (2a+1)*49 + p]
    fc2 (200,200) -> (256, 256) bf16 (zero padded)
    fc3 (cls,200) -> (256, 128) bf16 (zero padded)
    """
    wc, bc, w1, b1, w2, b2, w3, b3 = params

    wflat = wc.reshape(OC, C * K)                                   # (16, 4), (c,k) order
    wcb = jnp.zeros((OC, 2 * C * K + 1), jnp.float32)               # (16, 9)
    wcb = wcb.at[0:OC // 2, 0:C * K].set(wflat[0::2])               # even OCs -> alignment A
    wcb = wcb.at[OC // 2:OC, C * K:2 * C * K].set(wflat[1::2])      # odd OCs  -> alignment B
    wcb = wcb.at[0:OC // 2, 2 * C * K].set(bc[0::2])
    wcb = wcb.at[OC // 2:OC, 2 * C * K].set(bc[1::2])
    wcb = wcb.astype(jnp.bfloat16)

    # TODO(synk): per-generation weight-only quantization (int8 on v5e/v6e,
    # fp8 e4m3 on v7x) would halve fc1 bytes again; kept bf16 for tolerance.
    w1r = jnp.transpose(w1).reshape(OC, LP, H)                       # (16, 49, 200)
    w1p = jnp.zeros((OC // 2, LANE, HP), jnp.float32)
    w1p = w1p.at[:, 0:2 * LP:2, 0:H].set(w1r[0::2])                  # even OCs -> even lanes
    w1p = w1p.at[:, 1:2 * LP:2, 0:H].set(w1r[1::2])                  # odd OCs  -> odd lanes
    w1p = w1p.reshape(FLAT, HP).astype(jnp.bfloat16)                 # (1024, 256)
    b1p = jnp.zeros((1, HP), jnp.float32).at[0, 0:H].set(b1)

    w2p = jnp.zeros((HP, HP), jnp.float32).at[0:H, 0:H].set(jnp.transpose(w2))
    w2p = w2p.astype(jnp.bfloat16)
    b2p = jnp.zeros((1, HP), jnp.float32).at[0, 0:H].set(b2)

    w3p = jnp.zeros((HP, OP), jnp.float32).at[0:H, 0:classes].set(jnp.transpose(w3))
    w3p = w3p.astype(jnp.bfloat16)
    b3p = jnp.zeros((1, OP), jnp.float32).at[0, 0:classes].set(b3)

    return (wcb, w1p, b1p, w2p, b2p, w3p, b3p)


@functools.partial(jax.jit, static_argnames=("classes",))
def cnn_forward(x, prepared, classes=2):
    """x: (1, 2, 99) float32 (PyTorch NCL). Returns (1, classes)."""
    wcb, w1p, b1p, w2p, b2p, w3p, b3p = prepared
    # Left-pad by one zero (alignment-B columns read x[j-1]) and right-pad to 256.
    xp = jnp.pad(x, ((0, 0), (0, 0), (1, XW - L - 1)))               # (1, 2, 256)

    vmem = lambda: pl.BlockSpec(memory_space=pltpu.MemorySpace.VMEM)
    out = pl.pallas_call(
        cnn_fused_kernel,
        out_shape=jax.ShapeDtypeStruct((1, OP), jnp.float32),
        in_specs=[vmem(), vmem(),
                  pl.BlockSpec(memory_space=pl.ANY),   # fc1 weights: manual overlapped DMA
                  vmem(), vmem(), vmem(), vmem(), vmem()],
        out_specs=vmem(),
        scratch_shapes=[
            pltpu.VMEM((1, FLAT), jnp.bfloat16),       # flatten buffer
            pltpu.VMEM((FLAT, HP), jnp.bfloat16),      # fc1 weight staging
            pltpu.SemaphoreType.DMA,
        ],
    )(xp, wcb, w1p, b1p, w2p, b2p, w3p, b3p)
    # TODO(synk): if a real batch dim (>1) is ever added, expose it as a leading
    # grid axis marked "parallel" with constant index_maps on the weights so they
    # stay VMEM-resident across samples (also the only profitable way to use both
    # v7x TensorCores at this size — do NOT split FC1 across cores).
    return out[:, :classes]


def cnn_reference(x, params):
    """Plain-JAX f32 reference of the PyTorch forward (dropout = identity)."""
    wc, bc, w1, b1, w2, b2, w3, b3 = params
    conv = jax.lax.conv_general_dilated(
        x, wc, window_strides=(1,), padding="VALID",
        dimension_numbers=("NCH", "OIH", "NCH")) + bc.reshape(1, -1, 1)
    conv = jnp.maximum(conv, 0.0)                             # (1, 16, 98)
    pooled = conv.reshape(1, OC, LP, 2).max(axis=-1)          # (1, 16, 49)
    flat = pooled.reshape(1, -1)                              # (1, 784)
    h1 = jnp.maximum(flat @ w1.T + b1, 0.0)
    h2 = jnp.maximum(h1 @ w2.T + b2, 0.0)
    return h2 @ w3.T + b3


if __name__ == "__main__":
    num_channels, classes = 2, 2

    key = jax.random.PRNGKey(0)
    ks = jax.random.split(key, 9)
    x  = jax.random.normal(ks[0], (1, num_channels, L), jnp.float32)
    # Parameters in PyTorch layout: Linear weights are (out, in).
    wc = jax.random.normal(ks[1], (OC, num_channels, K), jnp.float32) * 0.10
    bc = jax.random.normal(ks[2], (OC,), jnp.float32) * 0.10
    w1 = jax.random.normal(ks[3], (H, OC * LP), jnp.float32) * 0.05
    b1 = jax.random.normal(ks[4], (H,), jnp.float32) * 0.05
    w2 = jax.random.normal(ks[5], (H, H), jnp.float32) * 0.05
    b2 = jax.random.normal(ks[6], (H,), jnp.float32) * 0.05
    w3 = jax.random.normal(ks[7], (classes, H), jnp.float32) * 0.05
    b3 = jax.random.normal(ks[8], (classes,), jnp.float32) * 0.05
    params = (wc, bc, w1, b1, w2, b2, w3, b3)

    prepared = jax.block_until_ready(prepare_params(params, classes))

    out = jax.block_until_ready(cnn_forward(x, prepared, classes=classes))
    assert out.shape == (1, classes), out.shape

    ref = jax.block_until_ready(cnn_reference(x, params))
    # bf16 matmul operands (f32 accumulation) vs the pure-f32 reference.
    np.testing.assert_allclose(np.asarray(out), np.asarray(ref),
                               rtol=2e-2, atol=2e-2)
    print("KERNEL_OK")
</pallas_src>

<mosaic_0001>
module attributes {stable_mosaic.version = 11 : i64} {
  func.func @cnn_fused_kernel(%arg0: memref<1x2x256xf32, #tpu.memory_space<vmem>>, %arg1: memref<16x9xbf16, #tpu.memory_space<vmem>>, %arg2: memref<1024x256xbf16, #tpu.memory_space<any>>, %arg3: memref<1x256xf32, #tpu.memory_space<vmem>>, %arg4: memref<256x256xbf16, #tpu.memory_space<vmem>>, %arg5: memref<1x256xf32, #tpu.memory_space<vmem>>, %arg6: memref<256x128xbf16, #tpu.memory_space<vmem>>, %arg7: memref<1x128xf32, #tpu.memory_space<vmem>>, %arg8: memref<1x128xf32, #tpu.memory_space<vmem>>, %arg9: memref<1x1024xbf16, #tpu.memory_space<vmem>>, %arg10: memref<1024x256xbf16, #tpu.memory_space<vmem>>, %arg11: memref<!tpu.dma_semaphore, #tpu.memory_space<semaphore_mem>>) attributes {dimension_semantics = [], scalar_prefetch = 0 : i64, scratch_operands = 3 : i64, tpu.core_type = #tpu.core_type<tc>} {
    tpu.enqueue_dma source(%arg2 : memref<1024x256xbf16, #tpu.memory_space<any>>) target(%arg10 : memref<1024x256xbf16, #tpu.memory_space<vmem>>) target_semaphore(%arg11 : memref<!tpu.dma_semaphore, #tpu.memory_space<semaphore_mem>>)
    %c0 = arith.constant 0 : index
    %c0_0 = arith.constant 0 : index
    %c0_1 = arith.constant 0 : index
    %0 = vector.load %arg0[%c0, %c0_0, %c0_1] : memref<1x2x256xf32, #tpu.memory_space<vmem>>, vector<1x2x256xf32>
    %1 = vector.shape_cast %0 : vector<1x2x256xf32> to vector<2x256xf32>
    %2 = vector.extract_strided_slice %1 {offsets = [0, 1], sizes = [1, 160], strides = [1, 1]} : vector<2x256xf32> to vector<1x160xf32>
    %3 = vector.extract_strided_slice %1 {offsets = [0, 2], sizes = [1, 160], strides = [1, 1]} : vector<2x256xf32> to vector<1x160xf32>
    %4 = vector.extract_strided_slice %1 {offsets = [1, 1], sizes = [1, 160], strides = [1, 1]} : vector<2x256xf32> to vector<1x160xf32>
    %5 = vector.extract_strided_slice %1 {offsets = [1, 2], sizes = [1, 160], strides = [1, 1]} : vector<2x256xf32> to vector<1x160xf32>
    %6 = vector.extract_strided_slice %1 {offsets = [0, 0], sizes = [1, 160], strides = [1, 1]} : vector<2x256xf32> to vector<1x160xf32>
    %7 = vector.extract_strided_slice %1 {offsets = [0, 1], sizes = [1, 160], strides = [1, 1]} : vector<2x256xf32> to vector<1x160xf32>
    %8 = vector.extract_strided_slice %1 {offsets = [1, 0], sizes = [1, 160], strides = [1, 1]} : vector<2x256xf32> to vector<1x160xf32>
    %9 = vector.extract_strided_slice %1 {offsets = [1, 1], sizes = [1, 160], strides = [1, 1]} : vector<2x256xf32> to vector<1x160xf32>
    %cst = arith.constant 1.000000e+00 : f32
    %10 = vector.broadcast %cst : f32 to vector<1x160xf32>
    %11 = tpu.concatenate %2, %3, %4, %5, %6, %7, %8, %9, %10 in 0 : vector<1x160xf32>, vector<1x160xf32>, vector<1x160xf32>, vector<1x160xf32>, vector<1x160xf32>, vector<1x160xf32>, vector<1x160xf32>, vector<1x160xf32>, vector<1x160xf32> -> vector<9x160xf32>
    %12 = arith.truncf %11 : vector<9x160xf32> to vector<9x160xbf16>
    %c0_2 = arith.constant 0 : index
    %c0_3 = arith.constant 0 : index
    %13 = vector.load %arg1[%c0_2, %c0_3] : memref<16x9xbf16, #tpu.memory_space<vmem>>, vector<16x9xbf16>
    %cst_4 = arith.constant dense<0.000000e+00> : vector<16x160xf32>
    %14 = tpu.matmul %13, %12, %cst_4 {dimension_numbers = #tpu.dot_dimension_numbers<[1], [0], [0], [1], [0, 0, 1, 1], [], []>} : vector<16x9xbf16>, vector<9x160xbf16>, vector<16x160xf32> -> vector<16x160xf32>
    %cst_5 = arith.constant 0.000000e+00 : f32
    %15 = vector.broadcast %cst_5 : f32 to vector<16x160xf32>
    %16 = arith.maximumf %14, %15 : vector<16x160xf32>
    %17 = vector.extract_strided_slice %16 {offsets = [0, 0], sizes = [16, 128], strides = [1, 1]} : vector<16x160xf32> to vector<16x128xf32>
    %18 = vector.extract_strided_slice %16 {offsets = [0, 1], sizes = [16, 128], strides = [1, 1]} : vector<16x160xf32> to vector<16x128xf32>
    %19 = arith.maximumf %17, %18 : vector<16x128xf32>
    %20 = tpu.iota {dimensions = array<i32: 1>} : vector<8x128xi32>
    %c1_i32 = arith.constant 1 : i32
    %21 = vector.broadcast %c1_i32 : i32 to vector<8x128xi32>
    %22 = arith.andi %20, %21 : vector<8x128xi32>
    %c1_i32_6 = arith.constant 1 : i32
    %23 = vector.broadcast %c1_i32_6 : i32 to vector<8x128xi32>
    %24 = arith.cmpi eq, %22, %23 : vector<8x128xi32>
    %25 = vector.extract_strided_slice %19 {offsets = [8, 0], sizes = [8, 128], strides = [1, 1]} : vector<16x128xf32> to vector<8x128xf32>
    %26 = vector.extract_strided_slice %19 {offsets = [0, 0], sizes = [8, 128], strides = [1, 1]} : vector<16x128xf32> to vector<8x128xf32>
    %27 = arith.select %24, %25, %26 : vector<8x128xi1>, vector<8x128xf32>
    %28 = arith.truncf %27 : vector<8x128xf32> to vector<8x128xbf16>
    %29 = vector.extract_strided_slice %28 {offsets = [0, 0], sizes = [1, 128], strides = [1, 1]} : vector<8x128xbf16> to vector<1x128xbf16>
    %c0_7 = arith.constant 0 : index
    %c0_8 = arith.constant 0 : index
    %30 = vector.load %arg9[%c0_7, %c0_8] : memref<1x1024xbf16, #tpu.memory_space<vmem>>, vector<1x128xbf16>
    tpu.vector_store %arg9[%c0_7, %c0_8], %29 {strides = array<i32>} : memref<1x1024xbf16, #tpu.memory_space<vmem>>, vector<1x128xbf16>,
    %31 = vector.extract_strided_slice %28 {offsets = [1, 0], sizes = [1, 128], strides = [1, 1]} : vector<8x128xbf16> to vector<1x128xbf16>
    %c0_9 = arith.constant 0 : index
    %c128 = arith.constant 128 : index
    %32 = vector.load %arg9[%c0_9, %c128] : memref<1x1024xbf16, #tpu.memory_space<vmem>>, vector<1x128xbf16>
    tpu.vector_store %arg9[%c0_9, %c128], %31 {strides = array<i32>} : memref<1x1024xbf16, #tpu.memory_space<vmem>>, vector<1x128xbf16>,
    %33 = vector.extract_strided_slice %28 {offsets = [2, 0], sizes = [1, 128], strides = [1, 1]} : vector<8x128xbf16> to vector<1x128xbf16>
    %c0_10 = arith.constant 0 : index
    %c256 = arith.constant 256 : index
    %34 = vector.load %arg9[%c0_10, %c256] : memref<1x1024xbf16, #tpu.memory_space<vmem>>, vector<1x128xbf16>
    tpu.vector_store %arg9[%c0_10, %c256], %33 {strides = array<i32>} : memref<1x1024xbf16, #tpu.memory_space<vmem>>, vector<1x128xbf16>,
    %35 = vector.extract_strided_slice %28 {offsets = [3, 0], sizes = [1, 128], strides = [1, 1]} : vector<8x128xbf16> to vector<1x128xbf16>
    %c0_11 = arith.constant 0 : index
    %c384 = arith.constant 384 : index
    %36 = vector.load %arg9[%c0_11, %c384] : memref<1x1024xbf16, #tpu.memory_space<vmem>>, vector<1x128xbf16>
    tpu.vector_store %arg9[%c0_11, %c384], %35 {strides = array<i32>} : memref<1x1024xbf16, #tpu.memory_space<vmem>>, vector<1x128xbf16>,
    %37 = vector.extract_strided_slice %28 {offsets = [4, 0], sizes = [1, 128], strides = [1, 1]} : vector<8x128xbf16> to vector<1x128xbf16>
    %c0_12 = arith.constant 0 : index
    %c512 = arith.constant 512 : index
    %38 = vector.load %arg9[%c0_12, %c512] : memref<1x1024xbf16, #tpu.memory_space<vmem>>, vector<1x128xbf16>
    tpu.vector_store %arg9[%c0_12, %c512], %37 {strides = array<i32>} : memref<1x1024xbf16, #tpu.memory_space<vmem>>, vector<1x128xbf16>,
    %39 = vector.extract_strided_slice %28 {offsets = [5, 0], sizes = [1, 128], strides = [1, 1]} : vector<8x128xbf16> to vector<1x128xbf16>
    %c0_13 = arith.constant 0 : index
    %c640 = arith.constant 640 : index
    %40 = vector.load %arg9[%c0_13, %c640] : memref<1x1024xbf16, #tpu.memory_space<vmem>>, vector<1x128xbf16>
    tpu.vector_store %arg9[%c0_13, %c640], %39 {strides = array<i32>} : memref<1x1024xbf16, #tpu.memory_space<vmem>>, vector<1x128xbf16>,
    %41 = vector.extract_strided_slice %28 {offsets = [6, 0], sizes = [1, 128], strides = [1, 1]} : vector<8x128xbf16> to vector<1x128xbf16>
    %c0_14 = arith.constant 0 : index
    %c768 = arith.constant 768 : index
    %42 = vector.load %arg9[%c0_14, %c768] : memref<1x1024xbf16, #tpu.memory_space<vmem>>, vector<1x128xbf16>
    tpu.vector_store %arg9[%c0_14, %c768], %41 {strides = array<i32>} : memref<1x1024xbf16, #tpu.memory_space<vmem>>, vector<1x128xbf16>,
    %43 = vector.extract_strided_slice %28 {offsets = [7, 0], sizes = [1, 128], strides = [1, 1]} : vector<8x128xbf16> to vector<1x128xbf16>
    %c0_15 = arith.constant 0 : index
    %c896 = arith.constant 896 : index
    %44 = vector.load %arg9[%c0_15, %c896] : memref<1x1024xbf16, #tpu.memory_space<vmem>>, vector<1x128xbf16>
    tpu.vector_store %arg9[%c0_15, %c896], %43 {strides = array<i32>} : memref<1x1024xbf16, #tpu.memory_space<vmem>>, vector<1x128xbf16>,
    %c0_16 = arith.constant 0 : index
    %c0_17 = arith.constant 0 : index
    %45 = vector.load %arg9[%c0_16, %c0_17] : memref<1x1024xbf16, #tpu.memory_space<vmem>>, vector<1x1024xbf16>
    tpu.wait_dma2 semaphore(%arg11 : memref<!tpu.dma_semaphore, #tpu.memory_space<semaphore_mem>>) src(%arg2 : memref<1024x256xbf16, #tpu.memory_space<any>>) dst(%arg10 : memref<1024x256xbf16, #tpu.memory_space<vmem>>)
    %c0_18 = arith.constant 0 : index
    %c0_19 = arith.constant 0 : index
    %46 = vector.load %arg10[%c0_18, %c0_19] : memref<1024x256xbf16, #tpu.memory_space<vmem>>, vector<1024x256xbf16>
    %cst_20 = arith.constant dense<0.000000e+00> : vector<1x256xf32>
    %47 = tpu.matmul %45, %46, %cst_20 {dimension_numbers = #tpu.dot_dimension_numbers<[1], [0], [0], [1], [0, 0, 1, 1], [], []>} : vector<1x1024xbf16>, vector<1024x256xbf16>, vector<1x256xf32> -> vector<1x256xf32>
    %c0_21 = arith.constant 0 : index
    %c0_22 = arith.constant 0 : index
    %48 = vector.load %arg3[%c0_21, %c0_22] : memref<1x256xf32, #tpu.memory_space<vmem>>, vector<1x256xf32>
    %49 = arith.addf %47, %48 : vector<1x256xf32>
    %cst_23 = arith.constant 0.000000e+00 : f32
    %50 = vector.broadcast %cst_23 : f32 to vector<1x256xf32>
    %51 = arith.maximumf %49, %50 : vector<1x256xf32>
    %52 = arith.truncf %51 : vector<1x256xf32> to vector<1x256xbf16>
    %c0_24 = arith.constant 0 : index
    %c0_25 = arith.constant 0 : index
    %53 = vector.load %arg4[%c0_24, %c0_25] : memref<256x256xbf16, #tpu.memory_space<vmem>>, vector<256x256xbf16>
    %cst_26 = arith.constant dense<0.000000e+00> : vector<1x256xf32>
    %54 = tpu.matmul %52, %53, %cst_26 {dimension_numbers = #tpu.dot_dimension_numbers<[1], [0], [0], [1], [0, 0, 1, 1], [], []>} : vector<1x256xbf16>, vector<256x256xbf16>, vector<1x256xf32> -> vector<1x256xf32>
    %c0_27 = arith.constant 0 : index
    %c0_28 = arith.constant 0 : index
    %55 = vector.load %arg5[%c0_27, %c0_28] : memref<1x256xf32, #tpu.memory_space<vmem>>, vector<1x256xf32>
    %56 = arith.addf %54, %55 : vector<1x256xf32>
    %cst_29 = arith.constant 0.000000e+00 : f32
    %57 = vector.broadcast %cst_29 : f32 to vector<1x256xf32>
    %58 = arith.maximumf %56, %57 : vector<1x256xf32>
    %59 = arith.truncf %58 : vector<1x256xf32> to vector<1x256xbf16>
    %c0_30 = arith.constant 0 : index
    %c0_31 = arith.constant 0 : index
    %60 = vector.load %arg6[%c0_30, %c0_31] : memref<256x128xbf16, #tpu.memory_space<vmem>>, vector<256x128xbf16>
    %cst_32 = arith.constant dense<0.000000e+00> : vector<1x128xf32>
    %61 = tpu.matmul %59, %60, %cst_32 {dimension_numbers = #tpu.dot_dimension_numbers<[1], [0], [0], [1], [0, 0, 1, 1], [], []>} : vector<1x256xbf16>, vector<256x128xbf16>, vector<1x128xf32> -> vector<1x128xf32>
    %c0_33 = arith.constant 0 : index
    %c0_34 = arith.constant 0 : index
    %62 = vector.load %arg7[%c0_33, %c0_34] : memref<1x128xf32, #tpu.memory_space<vmem>>, vector<1x128xf32>
    %63 = arith.addf %61, %62 : vector<1x128xf32>
    %c0_35 = arith.constant 0 : index
    %c0_36 = arith.constant 0 : index
    %64 = vector.load %arg8[%c0_35, %c0_36] : memref<1x128xf32, #tpu.memory_space<vmem>>, vector<1x128xf32>
    tpu.vector_store %arg8[%c0_35, %c0_36], %63 {strides = array<i32>} : memref<1x128xf32, #tpu.memory_space<vmem>>, vector<1x128xf32>,
    return
  }
}

</mosaic_0001>

<llo_original>
// kernel: cnn_forward.1
$region0: #{cnn_forward.1}
  #allocation0 [shape = 'u32[]', space=smem, size = 0x4, offset = 0x4, fixed_abs, tag = 'smem constant byte address 0x4 - core index']
  #allocation1 [shape = 'u32[144,128]{1,0:T(1,128)}', space=vmem, size = 0x12000, scoped, tag = 'internal scratch']
  #allocation2 [shape = 'bf16[1,1024]{1,0:T(2,128)(2,1)}', space=vmem, size = 0x1000, scoped, tag = 'scratch operand']
  #allocation3 [shape = 'bf16[1024,256]{1,0:T(16,128)(2,1)}', space=vmem, size = 0x80000, scoped, tag = 'scratch operand']
  #allocation4 [shape = 's32[1]{0}', space=sflag, size = 0x4, scoped, tag = 'scratch operand']
  #allocation11 [shape = 's32[]', space=sflag, size = 0x4, offset = 0, fixed_abs, tag = 'sflag constant byte address 0x0 - dummy sync flag']
  %s0 = inlined_call_operand.vmem [shape: f32[1,2,256], index: 0, kind: input, shape index: {}]
  %s1 = inlined_call_operand.vmem [shape: bf16[16,9], index: 1, kind: input, shape index: {}]
  %s2 = inlined_call_operand.hbm [shape: bf16[1024,256], index: 2, kind: input, shape index: {}]
  %s3 = inlined_call_operand.vmem [shape: f32[1,256], index: 3, kind: input, shape index: {}]
  %s4 = inlined_call_operand.hbm [shape: bf16[256,256], index: 4, kind: input, shape index: {}]
  %s5 = inlined_call_operand.vmem [shape: f32[1,256], index: 5, kind: input, shape index: {}]
  %s6 = inlined_call_operand.hbm [shape: bf16[256,128], index: 6, kind: input, shape index: {}]
  %s7 = inlined_call_operand.vmem [shape: f32[1,128], index: 7, kind: input, shape index: {}]
  %s8 = inlined_call_operand.hbm [shape: f32[1,128], index: 8, kind: output, shape index: {}]
  %s9 = sld [smem:[#allocation0]]
  $region46: #{cnn_forward.1} parent=0
    _
  %s11 = ssub.s32 1, %s9
  %s12 = scalar_select 0, %s11, %s9
  $region1: #{cnn_forward.1} parent=0
    #allocation5 [shape = 'u8[131072]{0}', space=vmem, size = 0x20000, scoped, tag = 'input window, operand 4, single buffered']
    #allocation6 [shape = 's32[1]{0}', space=sflag, size = 0x4, scoped, tag = 'scoped memory for cnn_forward.1']
    #allocation7 [shape = 's32[1]{0}', space=sflag, size = 0x4, scoped, tag = 'scoped memory for cnn_forward.1']
    #allocation8 [shape = 'u8[65536]{0}', space=vmem, size = 0x10000, scoped, tag = 'input window, operand 6, single buffered']
    #allocation9 [shape = 's32[1]{0}', space=sflag, size = 0x4, scoped, tag = 'scoped memory for cnn_forward.1']
    #allocation10 [shape = 'u8[512]{0}', space=vmem, size = 0x400, scoped, tag = 'output window, operand 0, single buffered']
    #allocation12 [shape = 'u32[9]{0}', space=smem, size = 0x24, scoped, tag = 'DMA stride descriptor']
    %13 = vsyncpa [#allocation6], 0
    %14 = vsyncpa [#allocation9], 0
    %15 = vsyncpa [#allocation7], 0
    // Predicated region
    $region2: #{cnn_forward.1} parent=1 // pred_check
      _
    $region3: #{cnn_forward.1} parent=1 // pred_check_branch
      %17 = sbr.rel (0) target = $region5
    $region4: #{cnn_forward.1} parent=1 // pred_region
      _
    $region5: #{cnn_forward.1} parent=1 // pred_fallthru
      _
    // Predicated region
    $region6: #{cnn_forward.1} parent=1 // pred_check
      _
    $region7: #{cnn_forward.1} parent=1 // pred_check_branch
      %19 = sbr.rel (0) target = $region9
    $region8: #{cnn_forward.1} parent=1 // pred_region
      _
    $region9: #{cnn_forward.1} parent=1 // pred_fallthru
      _
    // Predicated region
    $region10: #{cnn_forward.1} parent=1 // pred_check
      _
    $region11: #{cnn_forward.1} parent=1 // pred_check_branch
      %21 = sbr.rel (0) target = $region13
    $region12: #{cnn_forward.1} parent=1 // pred_region
      _
    $region13: #{cnn_forward.1} parent=1 // pred_fallthru
      _
    // Predicated region
    $region14: #{cnn_forward.1} parent=1 // pred_check
      _
    $region15: #{cnn_forward.1} parent=1 // pred_check_branch
      %23 = sbr.rel (0) target = $region17
    $region16: #{cnn_forward.1} parent=1 // pred_region
      %s25 = ssub.s32 4096, 4096
      %26 = vsyncadd [#allocation6], %s25
      %s27 = sshll.u32 [#allocation5], 4
      %s28 = int_to_ptr.vmem [resolvable:$true] %s27
      %33 = dma.hbm_to_vmem [thread:$0]  %s4, 4096, %s28, [#allocation6], 128, 128, 8
    $region17: #{cnn_forward.1} parent=1 // pred_fallthru
      _
    // Predicated region
    $region18: #{cnn_forward.1} parent=1 // pred_check
      _
    $region19: #{cnn_forward.1} parent=1 // pred_check_branch
      %35 = sbr.rel (0) target = $region21
    $region20: #{cnn_forward.1} parent=1 // pred_region
      _
    $region21: #{cnn_forward.1} parent=1 // pred_fallthru
      _
    // Predicated region
    $region22: #{cnn_forward.1} parent=1 // pred_check
      _
    $region23: #{cnn_forward.1} parent=1 // pred_check_branch
      %37 = sbr.rel (0) target = $region25
    $region24: #{cnn_forward.1} parent=1 // pred_region
      %s39 = ssub.s32 2048, 2048
      %40 = vsyncadd [#allocation9], %s39
      %s41 = sshll.u32 [#allocation8], 4
      %s42 = int_to_ptr.vmem [resolvable:$true] %s41
      %47 = dma.hbm_to_vmem [thread:$0]  %s6, 2048, %s42, [#allocation9], 64, 64, 4
    $region25: #{cnn_forward.1} parent=1 // pred_fallthru
      _
    // Predicated region
    $region26: #{cnn_forward.1} parent=1 // pred_check
      _
    $region27: #{cnn_forward.1} parent=1 // pred_check_branch
      %49 = sbr.rel (0) target = $region29
    $region28: #{cnn_forward.1} parent=1 // pred_region
      _
    $region29: #{cnn_forward.1} parent=1 // pred_fallthru
      _
    // Predicated region
    $region30: #{cnn_forward.1} parent=1 // pred_check
      _
    $region31: #{cnn_forward.1} parent=1 // pred_check_branch
      %51 = sbr.rel (0) target = $region33
    $region32: #{cnn_forward.1} parent=1 // pred_region
      %52 = dma.done [#allocation6], 4096
    $region33: #{cnn_forward.1} parent=1 // pred_fallthru
      _
    // Predicated region
    $region34: #{cnn_forward.1} parent=1 // pred_check
      _
    $region35: #{cnn_forward.1} parent=1 // pred_check_branch
      %54 = sbr.rel (0) target = $region37
    $region36: #{cnn_forward.1} parent=1 // pred_region
      %55 = dma.done [#allocation9], 2048
    $region37: #{cnn_forward.1} parent=1 // pred_fallthru
      _
    %s58 = sshll.u32 1, 14
    %s59 = sxor.u32 4294967295, %s58
    %s61 = sld [smem:[#allocation0]]
    %s62 = sadd.s32 2, %s61
    %s64 = sshll.u32 7, 26
    %s65 = sxor.u32 4294967295, %s64
    %s66 = sand.u32 0, %s65
    %s67 = sshll.u32 %s62, 26
    %s68 = sor.u32 %s66, %s67
    %s69 = sshll.u32 [#allocation3], 4
    %s70 = int_to_ptr.vmem [resolvable:$true] %s69
    %73 = sst [smem:[#allocation12]] 256
    %s74 = scalar_lea.smem [#allocation12], 1
    %75 = sst [smem:[%s74]] 256
    %s76 = scalar_lea.smem [#allocation12], 2
    %77 = sst [smem:[%s76]] 2
    %s78 = scalar_lea.smem [#allocation12], 3
    %79 = sst [smem:[%s78]] 64
    %s80 = scalar_lea.smem [#allocation12], 4
    %81 = sst [smem:[%s80]] 128
    %s82 = scalar_lea.smem [#allocation12], 5
    %83 = sst [smem:[%s82]] 2
    %s84 = scalar_lea.smem [#allocation12], 6
    %85 = sst [smem:[%s84]] 128
    %s86 = scalar_lea.smem [#allocation12], 7
    %87 = sst [smem:[%s86]] 64
    %s88 = scalar_lea.smem [#allocation12], 8
    %89 = sst [smem:[%s88]] 4
    %91 = dma.general %s2, 16384, %s70, [#allocation4], [#allocation11], [#allocation12], %s68, 0
    %v92 = vld [vmem:[%s0] sm:$0xf]
    %v94 = vlaneseq
    %v95 = vshrl.u32 %v94, 7
    %v96 = vsub.s32 0, %v95
    %v97 = vrot.slane %v92, %v96
    %v98 = vlaneseq
    %v99 = vshrl.u32 %v98, 7
    %v100 = vsub.s32 2, %v99
    %v101 = vrot.slane %v92, %v100
    %104 = vrot.lane.b32.xlu0 %v97, 127
    %v105 = vpop.permute.xlu0 %104
    %106 = vrot.lane.b32.xlu0 %v101, 127
    %v107 = vpop.permute.xlu0 %106
    %vm108 = vcmask 1039360
    %v109 = vsel %vm108, %v105, %v107
    %v112 = vlaneseq
    %v113 = vshrl.u32 %v112, 7
    %v114 = vsub.s32 1, %v113
    %v115 = vrot.slane %v92, %v114
    %v116 = vlaneseq
    %v117 = vshrl.u32 %v116, 7
    %v118 = vsub.s32 3, %v117
    %v119 = vrot.slane %v92, %v118
    %122 = vrot.lane.b32.xlu0 %v115, 127
    %v123 = vpop.permute.xlu0 %122
    %124 = vrot.lane.b32.xlu0 %v119, 127
    %v125 = vpop.permute.xlu0 %124
    %v126 = vsel %vm108, %v123, %v125
    %129 = vrot.lane.b32.xlu0 %v97, 1
    %v130 = vpop.permute.xlu0 %129
    %131 = vrot.lane.b32.xlu0 %v101, 1
    %v132 = vpop.permute.xlu0 %131
    %vm133 = vcmask 7168
    %v134 = vsel %vm133, %v130, %v132
    %137 = vrot.lane.b32.xlu0 %v115, 1
    %v138 = vpop.permute.xlu0 %137
    %139 = vrot.lane.b32.xlu0 %v119, 1
    %v140 = vpop.permute.xlu0 %139
    %v141 = vsel %vm133, %v138, %v140
    %vm144 = vcmask 1040384
    %v145 = vsel %vm144, %v97, %v109
    %v146 = vsel %vm144, %v101, %v107
    %vm147 = vcmask 1041408
    %v148 = vsel %vm147, %v145, %v115
    %v149 = vsel %vm147, %v146, %v119
    %vm150 = vcmask 1042432
    %v151 = vsel %vm150, %v148, %v126
    %v152 = vsel %vm150, %v149, %v125
    %vm153 = vcmask 1043456
    %v154 = vsel %vm153, %v151, %v130
    %v155 = vsel %vm153, %v152, %v134
    %vm156 = vcmask 1044480
    %v157 = vsel %vm156, %v154, %v97
    %v158 = vsel %vm156, %v155, %v101
    %vm159 = vcmask 1045504
    %v160 = vsel %vm159, %v157, %v138
    %v161 = vsel %vm159, %v158, %v141
    %vm162 = vcmask 1046528
    %v163 = vsel %vm162, %v160, %v115
    %v164 = vsel %vm162, %v161, %v119
    %v165 = vpack.c.bf16 1.0, %v163
    %v166 = vpack.c.bf16 1.0, %v164
    %v167 = vld [vmem:[%s1] sm:$0xf]
    %v168 = vld [vmem:[%s1 + $0x4] sm:$0xf]
    %v171 = vunpack.c.l.b16 %v167
    %v172 = vunpack.c.l.b16 %v168
    %v173 = vpack.c.b16 %v172, %v171
    %176 = vrot.lane.b32.xlu0 %v165, 127
    %v177 = vpop.permute.xlu0 %176
    %178 = vrot.lane.b32.xlu0 %v166, 127
    %v179 = vpop.permute.xlu0 %178
    %vm180 = vcmask 1039360
    %v181 = vsel %vm180, %v177, %v179
    %vm182 = vcmask 72704
    %v184 = vsel %vm182, %v173, 0
    %v186 = vsel %vm153, 4294967295, 65535
    %v187 = vsel %vm156, %v186, 0
    %v189 = vand.u32 %v181, %v187
    %v192 = vand.u32 %v179, %v187
    %194 = vmatprep.subr.bf16.mxu0 %v192
    %195 = vmatpush1.bf16.msra.mxu0 %v189
    %196 = vmatprep.subr.bf16.mxu0 0
    %197 = vmatpush1.bf16.msra.mxu0 0
    %198 = vmatprep.subr.bf16.mxu0 0
    %199 = vmatpush1.bf16.msra.mxu0 0
    %200 = vmatprep.subr.bf16.mxu0 0
    %201 = vmatpush1.bf16.msra.mxu0 0
    %202 = vmatprep.subr.bf16.mxu0 0
    %203 = vmatpush1.bf16.msra.mxu0 0
    %204 = vmatprep.subr.bf16.mxu0 0
    %205 = vmatpush1.bf16.msra.mxu0 0
    %206 = vmatprep.subr.bf16.mxu0 0
    %207 = vmatpush1.bf16.msra.mxu0 0
    %208 = vmatprep.subr.bf16.mxu0 0
    %209 = vmatpush1.bf16.msra.mxu0 0
    %210 = vmatprep.subr.bf16.mxu0 0
    %211 = vmatpush1.bf16.msra.mxu0 0
    %212 = vmatprep.subr.bf16.mxu0 0
    %213 = vmatpush1.bf16.msra.mxu0 0
    %214 = vmatprep.subr.bf16.mxu0 0
    %215 = vmatpush1.bf16.msra.mxu0 0
    %216 = vmatprep.subr.bf16.mxu0 0
    %217 = vmatpush1.bf16.msra.mxu0 0
    %218 = vmatprep.subr.bf16.mxu0 0
    %219 = vmatpush1.bf16.msra.mxu0 0
    %220 = vmatprep.subr.bf16.mxu0 0
    %221 = vmatpush1.bf16.msra.mxu0 0
    %222 = vmatprep.subr.bf16.mxu0 0
    %223 = vmatpush1.bf16.msra.mxu0 0
    %224 = vmatprep.subr.bf16.mxu0 0
    %225 = vmatpush1.bf16.msra.mxu0 0
    %226 = vmatprep.mubr.bf16.mxu0 0
    %227 = vmatmul.mubr.bf16.gmra.mrb[0].mxu0 %v184
    %v228 = vpop.f32.mrb[0].mxu0
    %v229 = vadd.f32 0.0, %v228
    %v230 = vpop.f32.mrb[0].mxu0
    %v231 = vadd.f32 0.0, %v230
    %v232 = vpop.f32.mrb[0].mxu0
    %v233 = vadd.f32 0.0, %v232
    %v234 = vpop.f32.mrb[0].mxu0
    %v235 = vadd.f32 0.0, %v234
    %236 = vdwg.mxu0
    %v237 = vmax.f32 %v229, 0.0
    %v238 = vmax.f32 %v231, 0.0
    %v239 = vmax.f32 %v233, 0.0
    %v240 = vmax.f32 %v235, 0.0
    %245 = vrot.lane.b32.xlu0 %v237, 127
    %v246 = vpop.permute.xlu0 %245
    %247 = vrot.lane.b32.xlu0 %v238, 127
    %v248 = vpop.permute.xlu0 %247
    %249 = vrot.lane.b32.xlu0 %v239, 127
    %v250 = vpop.permute.xlu0 %249
    %251 = vrot.lane.b32.xlu0 %v240, 127
    %v252 = vpop.permute.xlu0 %251
    %v253 = vsel %vm108, %v246, %v248
    %v254 = vsel %vm108, %v250, %v252
    %v257 = vmax.f32 %v237, %v253
    %v258 = vmax.f32 %v239, %v254
    %v259 = vlaneseq
    %v260 = vand.u32 %v259, 127
    %v261 = vand.u32 %v260, 1
    %vm262 = vcmp.eq.s32.totalorder %v261, 1
    %v263 = vsel %vm262, %v258, %v257
    %v264 = vpack.c.bf16 %v263, %v263
    %vm265 = vcmask 1040384
    %vm266 = vsmask.f32 256
    %vm267 = vmand %vm265, %vm266
    %v268 = vld [vmem:[#allocation2] sm:$0x1]
    %v269 = vsel %vm267, %v264, %v268
    %270 = vst [vmem:[#allocation2] sm:$0x1] %v269
    %v273 = vunpack.c.l.s4 1966171168
    %v274 = vunpack.c.0.s8 %v273
    %v275 = vlaneseq
    %v276 = vshrl.u32 %v275, 7
    %v277 = vsub.s32 %v274, %v276
    %v278 = vrot.slane %v264, %v277
    %v280 = vunpack.c.l.s4 1966171168
    %v281 = vunpack.c.0.s8 %v280
    %v282 = vlaneseq
    %v283 = vshrl.u32 %v282, 7
    %v284 = vsub.s32 %v281, %v283
    %v285 = vrot.slane %v278, %v284
    %v287 = vshrl.u32 %v285, 16
    %v289 = vrot.slane %v287, 7
    %v290 = vrot.slane %v289, 1
    %v292 = vld [vmem:[#allocation2 + $0x1] sm:$0x1]
    %v293 = vsel %vm267, %v290, %v292
    %294 = vst [vmem:[#allocation2 + $0x1] sm:$0x1] %v293
    %v295 = vcombine.high %v278, %v278
    %v297 = vunpack.c.l.s4 1966171168
    %v298 = vunpack.c.0.s8 %v297
    %v299 = vlaneseq
    %v300 = vshrl.u32 %v299, 7
    %v301 = vsub.s32 %v298, %v300
    %v302 = vrot.slane %v295, %v301
    %v304 = vld [vmem:[#allocation2 + $0x2] sm:$0x1]
    %v305 = vsel %vm267, %v302, %v304
    %306 = vst [vmem:[#allocation2 + $0x2] sm:$0x1] %v305
    %v308 = vshrl.u32 %v302, 16
    %v310 = vrot.slane %v308, 7
    %v311 = vrot.slane %v310, 1
    %v313 = vld [vmem:[#allocation2 + $0x3] sm:$0x1]
    %v314 = vsel %vm267, %v311, %v313
    %315 = vst [vmem:[#allocation2 + $0x3] sm:$0x1] %v314
    %v316 = vcombine.high %v285, %v285
    %v318 = vld [vmem:[#allocation2 + $0x4] sm:$0x1]
    %v319 = vsel %vm267, %v316, %v318
    %320 = vst [vmem:[#allocation2 + $0x4] sm:$0x1] %v319
    %v322 = vshrl.u32 %v316, 16
    %v324 = vrot.slane %v322, 7
    %v325 = vrot.slane %v324, 1
    %v327 = vld [vmem:[#allocation2 + $0x5] sm:$0x1]
    %v328 = vsel %vm267, %v325, %v327
    %329 = vst [vmem:[#allocation2 + $0x5] sm:$0x1] %v328
    %v330 = vcombine.high %v302, %v302
    %v332 = vld [vmem:[#allocation2 + $0x6] sm:$0x1]
    %v333 = vsel %vm267, %v330, %v332
    %334 = vst [vmem:[#allocation2 + $0x6] sm:$0x1] %v333
    %v336 = vshrl.u32 %v330, 16
    %v338 = vrot.slane %v336, 7
    %v339 = vrot.slane %v338, 1
    %v341 = vld [vmem:[#allocation2 + $0x7] sm:$0x1]
    %v342 = vsel %vm267, %v339, %v341
    %343 = vst [vmem:[#allocation2 + $0x7] sm:$0x1] %v342
    %v344 = vld [vmem:[#allocation2] sm:$0xff]
    %s345 = smul.u32 4, 128
    %s346 = smul.u32 %s345, 2
    %s347 = sshll.u32 %s346, 4
    %348 = dma.done [#allocation4], %s347
    %v349 = vld [vmem:[#allocation3] sm:$0xff]
    %v350 = vld [vmem:[#allocation3 + $0x8] sm:$0xff]
    %v351 = vld [vmem:[#allocation3 + $0x10] sm:$0xff]
    %v352 = vld [vmem:[#allocation3 + $0x18] sm:$0xff]
    %v353 = vld [vmem:[#allocation3 + $0x20] sm:$0xff]
    %v354 = vld [vmem:[#allocation3 + $0x28] sm:$0xff]
    %v355 = vld [vmem:[#allocation3 + $0x30] sm:$0xff]
    %v356 = vld [vmem:[#allocation3 + $0x38] sm:$0xff]
    %v357 = vld [vmem:[#allocation3 + $0x40] sm:$0xff]
    %v358 = vld [vmem:[#allocation3 + $0x48] sm:$0xff]
    %v359 = vld [vmem:[#allocation3 + $0x50] sm:$0xff]
    %v360 = vld [vmem:[#allocation3 + $0x58] sm:$0xff]
    %v361 = vld [vmem:[#allocation3 + $0x60] sm:$0xff]
    %v362 = vld [vmem:[#allocation3 + $0x68] sm:$0xff]
    %v363 = vld [vmem:[#allocation3 + $0x70] sm:$0xff]
    %v364 = vld [vmem:[#allocation3 + $0x78] sm:$0xff]
    %v365 = vld [vmem:[#allocation3 + $0x80] sm:$0xff]
    %v366 = vld [vmem:[#allocation3 + $0x88] sm:$0xff]
    %v367 = vld [vmem:[#allocation3 + $0x90] sm:$0xff]
    %v368 = vld [vmem:[#allocation3 + $0x98] sm:$0xff]
    %v369 = vld [vmem:[#allocation3 + $0xa0] sm:$0xff]
    %v370 = vld [vmem:[#allocation3 + $0xa8] sm:$0xff]
    %v371 = vld [vmem:[#allocation3 + $0xb0] sm:$0xff]
    %v372 = vld [vmem:[#allocation3 + $0xb8] sm:$0xff]
    %v373 = vld [vmem:[#allocation3 + $0xc0] sm:$0xff]
    %v374 = vld [vmem:[#allocation3 + $0xc8] sm:$0xff]
    %v375 = vld [vmem:[#allocation3 + $0xd0] sm:$0xff]
    %v376 = vld [vmem:[#allocation3 + $0xd8] sm:$0xff]
    %v377 = vld [vmem:[#allocation3 + $0xe0] sm:$0xff]
    %v378 = vld [vmem:[#allocation3 + $0xe8] sm:$0xff]
    %v379 = vld [vmem:[#allocation3 + $0xf0] sm:$0xff]
    %v380 = vld [vmem:[#allocation3 + $0xf8] sm:$0xff]
    %v381 = vld [vmem:[#allocation3 + $0x100] sm:$0xff]
    %v382 = vld [vmem:[#allocation3 + $0x108] sm:$0xff]
    %v383 = vld [vmem:[#allocation3 + $0x110] sm:$0xff]
    %v384 = vld [vmem:[#allocation3 + $0x118] sm:$0xff]
    %v385 = vld [vmem:[#allocation3 + $0x120] sm:$0xff]
    %v386 = vld [vmem:[#allocation3 + $0x128] sm:$0xff]
    %v387 = vld [vmem:[#allocation3 + $0x130] sm:$0xff]
    %v388 = vld [vmem:[#allocation3 + $0x138] sm:$0xff]
    %v389 = vld [vmem:[#allocation3 + $0x140] sm:$0xff]
    %v390 = vld [vmem:[#allocation3 + $0x148] sm:$0xff]
    %v391 = vld [vmem:[#allocation3 + $0x150] sm:$0xff]
    %v392 = vld [vmem:[#allocation3 + $0x158] sm:$0xff]
    %v393 = vld [vmem:[#allocation3 + $0x160] sm:$0xff]
    %v394 = vld [vmem:[#allocation3 + $0x168] sm:$0xff]
    %v395 = vld [vmem:[#allocation3 + $0x170] sm:$0xff]
    %v396 = vld [vmem:[#allocation3 + $0x178] sm:$0xff]
    %v397 = vld [vmem:[#allocation3 + $0x180] sm:$0xff]
    %v398 = vld [vmem:[#allocation3 + $0x188] sm:$0xff]
    %v399 = vld [vmem:[#allocation3 + $0x190] sm:$0xff]
    %v400 = vld [vmem:[#allocation3 + $0x198] sm:$0xff]
    %v401 = vld [vmem:[#allocation3 + $0x1a0] sm:$0xff]
    %v402 = vld [vmem:[#allocation3 + $0x1a8] sm:$0xff]
    %v403 = vld [vmem:[#allocation3 + $0x1b0] sm:$0xff]
    %v404 = vld [vmem:[#allocation3 + $0x1b8] sm:$0xff]
    %v405 = vld [vmem:[#allocation3 + $0x1c0] sm:$0xff]
    %v406 = vld [vmem:[#allocation3 + $0x1c8] sm:$0xff]
    %v407 = vld [vmem:[#allocation3 + $0x1d0] sm:$0xff]
    %v408 = vld [vmem:[#allocation3 + $0x1d8] sm:$0xff]
    %v409 = vld [vmem:[#allocation3 + $0x1e0] sm:$0xff]
    %v410 = vld [vmem:[#allocation3 + $0x1e8] sm:$0xff]
    %v411 = vld [vmem:[#allocation3 + $0x1f0] sm:$0xff]
    %v412 = vld [vmem:[#allocation3 + $0x1f8] sm:$0xff]
    %v413 = vld [vmem:[#allocation3 + $0x200] sm:$0xff]
    %v414 = vld [vmem:[#allocation3 + $0x208] sm:$0xff]
    %v415 = vld [vmem:[#allocation3 + $0x210] sm:$0xff]
    %v416 = vld [vmem:[#allocation3 + $0x218] sm:$0xff]
    %v417 = vld [vmem:[#allocation3 + $0x220] sm:$0xff]
    %v418 = vld [vmem:[#allocation3 + $0x228] sm:$0xff]
    %v419 = vld [vmem:[#allocation3 + $0x230] sm:$0xff]
    %v420 = vld [vmem:[#allocation3 + $0x238] sm:$0xff]
    %v421 = vld [vmem:[#allocation3 + $0x240] sm:$0xff]
    %v422 = vld [vmem:[#allocation3 + $0x248] sm:$0xff]
    %v423 = vld [vmem:[#allocation3 + $0x250] sm:$0xff]
    %v424 = vld [vmem:[#allocation3 + $0x258] sm:$0xff]
    %v425 = vld [vmem:[#allocation3 + $0x260] sm:$0xff]
    %v426 = vld [vmem:[#allocation3 + $0x268] sm:$0xff]
    %v427 = vld [vmem:[#allocation3 + $0x270] sm:$0xff]
    %v428 = vld [vmem:[#allocation3 + $0x278] sm:$0xff]
    %v429 = vld [vmem:[#allocation3 + $0x280] sm:$0xff]
    %v430 = vld [vmem:[#allocation3 + $0x288] sm:$0xff]
    %v431 = vld [vmem:[#allocation3 + $0x290] sm:$0xff]
    %v432 = vld [vmem:[#allocation3 + $0x298] sm:$0xff]
    %v433 = vld [vmem:[#allocation3 + $0x2a0] sm:$0xff]
    %v434 = vld [vmem:[#allocation3 + $0x2a8] sm:$0xff]
    %v435 = vld [vmem:[#allocation3 + $0x2b0] sm:$0xff]
    %v436 = vld [vmem:[#allocation3 + $0x2b8] sm:$0xff]
    %v437 = vld [vmem:[#allocation3 + $0x2c0] sm:$0xff]
    %v438 = vld [vmem:[#allocation3 + $0x2c8] sm:$0xff]
    %v439 = vld [vmem:[#allocation3 + $0x2d0] sm:$0xff]
    %v440 = vld [vmem:[#allocation3 + $0x2d8] sm:$0xff]
    %v441 = vld [vmem:[#allocation3 + $0x2e0] sm:$0xff]
    %v442 = vld [vmem:[#allocation3 + $0x2e8] sm:$0xff]
    %v443 = vld [vmem:[#allocation3 + $0x2f0] sm:$0xff]
    %v444 = vld [vmem:[#allocation3 + $0x2f8] sm:$0xff]
    %v445 = vld [vmem:[#allocation3 + $0x300] sm:$0xff]
    %v446 = vld [vmem:[#allocation3 + $0x308] sm:$0xff]
    %v447 = vld [vmem:[#allocation3 + $0x310] sm:$0xff]
    %v448 = vld [vmem:[#allocation3 + $0x318] sm:$0xff]
    %v449 = vld [vmem:[#allocation3 + $0x320] sm:$0xff]
    %v450 = vld [vmem:[#allocation3 + $0x328] sm:$0xff]
    %v451 = vld [vmem:[#allocation3 + $0x330] sm:$0xff]
    %v452 = vld [vmem:[#allocation3 + $0x338] sm:$0xff]
    %v453 = vld [vmem:[#allocation3 + $0x340] sm:$0xff]
    %v454 = vld [vmem:[#allocation3 + $0x348] sm:$0xff]
    %v455 = vld [vmem:[#allocation3 + $0x350] sm:$0xff]
    %v456 = vld [vmem:[#allocation3 + $0x358] sm:$0xff]
    %v457 = vld [vmem:[#allocation3 + $0x360] sm:$0xff]
    %v458 = vld [vmem:[#allocation3 + $0x368] sm:$0xff]
    %v459 = vld [vmem:[#allocation3 + $0x370] sm:$0xff]
    %v460 = vld [vmem:[#allocation3 + $0x378] sm:$0xff]
    %v461 = vld [vmem:[#allocation3 + $0x380] sm:$0xff]
    %v462 = vld [vmem:[#allocation3 + $0x388] sm:$0xff]
    %v463 = vld [vmem:[#allocation3 + $0x390] sm:$0xff]
    %v464 = vld [vmem:[#allocation3 + $0x398] sm:$0xff]
    %v465 = vld [vmem:[#allocation3 + $0x3a0] sm:$0xff]
    %v466 = vld [vmem:[#allocation3 + $0x3a8] sm:$0xff]
    %v467 = vld [vmem:[#allocation3 + $0x3b0] sm:$0xff]
    %v468 = vld [vmem:[#allocation3 + $0x3b8] sm:$0xff]
    %v469 = vld [vmem:[#allocation3 + $0x3c0] sm:$0xff]
    %v470 = vld [vmem:[#allocation3 + $0x3c8] sm:$0xff]
    %v471 = vld [vmem:[#allocation3 + $0x3d0] sm:$0xff]
    %v472 = vld [vmem:[#allocation3 + $0x3d8] sm:$0xff]
    %v473 = vld [vmem:[#allocation3 + $0x3e0] sm:$0xff]
    %v474 = vld [vmem:[#allocation3 + $0x3e8] sm:$0xff]
    %v475 = vld [vmem:[#allocation3 + $0x3f0] sm:$0xff]
    %v476 = vld [vmem:[#allocation3 + $0x3f8] sm:$0xff]
    %v477 = vld [vmem:[%s3] sm:$0x3]
    %v479 = vcombine.high %v344, %v344
    %v481 = vunpack.c.l.s4 1966171168
    %v482 = vunpack.c.0.s8 %v481
    %v483 = vlaneseq
    %v484 = vshrl.u32 %v483, 7
    %v485 = vsub.s32 %v482, %v484
    %v486 = vrot.slane %v344, %v485
    %v488 = vunpack.c.l.s4 1966171168
    %v489 = vunpack.c.0.s8 %v488
    %v490 = vlaneseq
    %v491 = vshrl.u32 %v490, 7
    %v492 = vsub.s32 %v489, %v491
    %v493 = vrot.slane %v479, %v492
    %v494 = vcombine.high %v486, %v486
    %v495 = vcombine.high %v493, %v493
    %v497 = vunpack.c.l.s4 1966171168
    %v498 = vunpack.c.0.s8 %v497
    %v499 = vlaneseq
    %v500 = vshrl.u32 %v499, 7
    %v501 = vsub.s32 %v498, %v500
    %v502 = vrot.slane %v486, %v501
    %v504 = vunpack.c.l.s4 1966171168
    %v505 = vunpack.c.0.s8 %v504
    %v506 = vlaneseq
    %v507 = vshrl.u32 %v506, 7
    %v508 = vsub.s32 %v505, %v507
    %v509 = vrot.slane %v493, %v508
    %v511 = vunpack.c.l.s4 1966171168
    %v512 = vunpack.c.0.s8 %v511
    %v513 = vlaneseq
    %v514 = vshrl.u32 %v513, 7
    %v515 = vsub.s32 %v512, %v514
    %v516 = vrot.slane %v494, %v515
    %v518 = vunpack.c.l.s4 1966171168
    %v519 = vunpack.c.0.s8 %v518
    %v520 = vlaneseq
    %v521 = vshrl.u32 %v520, 7
    %v522 = vsub.s32 %v519, %v521
    %v523 = vrot.slane %v495, %v522
    %v524 = vcombine.high %v502, %v502
    %v525 = vcombine.high %v509, %v509
    %v526 = vcombine.high %v516, %v516
    %v527 = vcombine.high %v523, %v523
    %v537 = vlaneseq
    %v538 = vshrl.u32 %v537, 7
    %v539 = vsub.s32 0, %v538
    %v540 = vrot.slane %v477, %v539
    %v541 = vlaneseq
    %v542 = vshrl.u32 %v541, 7
    %v543 = vsub.s32 1, %v542
    %v544 = vrot.slane %v477, %v543
    %547 = vmatprep.subr.bf16.mxu0 %v350
    %548 = vmatpush1.bf16.msra.mxu0 %v349
    %549 = vmatprep.subr.bf16.mxu0 %v352
    %550 = vmatpush1.bf16.msra.mxu0 %v351
    %551 = vmatprep.subr.bf16.mxu0 %v354
    %552 = vmatpush1.bf16.msra.mxu0 %v353
    %553 = vmatprep.subr.bf16.mxu0 %v356
    %554 = vmatpush1.bf16.msra.mxu0 %v355
    %555 = vmatprep.subr.bf16.mxu0 %v358
    %556 = vmatpush1.bf16.msra.mxu0 %v357
    %557 = vmatprep.subr.bf16.mxu0 %v360
    %558 = vmatpush1.bf16.msra.mxu0 %v359
    %559 = vmatprep.subr.bf16.mxu0 %v362
    %560 = vmatpush1.bf16.msra.mxu0 %v361
    %561 = vmatprep.subr.bf16.mxu0 %v364
    %562 = vmatpush1.bf16.msra.mxu0 %v363
    %563 = vmatprep.subr.bf16.mxu0 %v366
    %564 = vmatpush1.bf16.msra.mxu0 %v365
    %565 = vmatprep.subr.bf16.mxu0 %v368
    %566 = vmatpush1.bf16.msra.mxu0 %v367
    %567 = vmatprep.subr.bf16.mxu0 %v370
    %568 = vmatpush1.bf16.msra.mxu0 %v369
    %569 = vmatprep.subr.bf16.mxu0 %v372
    %570 = vmatpush1.bf16.msra.mxu0 %v371
    %571 = vmatprep.subr.bf16.mxu0 %v374
    %572 = vmatpush1.bf16.msra.mxu0 %v373
    %573 = vmatprep.subr.bf16.mxu0 %v376
    %574 = vmatpush1.bf16.msra.mxu0 %v375
    %575 = vmatprep.subr.bf16.mxu0 %v378
    %576 = vmatpush1.bf16.msra.mxu0 %v377
    %577 = vmatprep.subr.bf16.mxu0 %v380
    %578 = vmatpush1.bf16.msra.mxu0 %v379
    %579 = vmatprep.mubr.bf16.mxu0 %v516
    %580 = vmatmul.mubr.bf16.gmra.mrb[0].mxu0 %v502
    %v581 = vpop.f32.mrb[0].mxu0
    %v582 = vadd.f32 %v540, %v581
    %v583 = vpop.f32.mrb[0].mxu0
    %v584 = vadd.f32 %v544, %v583
    %v585 = vpop.f32.mrb[0].mxu0
    %v586 = vpop.f32.mrb[0].mxu0
    %587 = vdwg.mxu0
    %588 = vmatprep.subr.bf16.mxu0 %v382
    %589 = vmatpush1.bf16.msra.mxu0 %v381
    %590 = vmatprep.subr.bf16.mxu0 %v384
    %591 = vmatpush1.bf16.msra.mxu0 %v383
    %592 = vmatprep.subr.bf16.mxu0 %v386
    %593 = vmatpush1.bf16.msra.mxu0 %v385
    %594 = vmatprep.subr.bf16.mxu0 %v388
    %595 = vmatpush1.bf16.msra.mxu0 %v387
    %596 = vmatprep.subr.bf16.mxu0 %v390
    %597 = vmatpush1.bf16.msra.mxu0 %v389
    %598 = vmatprep.subr.bf16.mxu0 %v392
    %599 = vmatpush1.bf16.msra.mxu0 %v391
    %600 = vmatprep.subr.bf16.mxu0 %v394
    %601 = vmatpush1.bf16.msra.mxu0 %v393
    %602 = vmatprep.subr.bf16.mxu0 %v396
    %603 = vmatpush1.bf16.msra.mxu0 %v395
    %604 = vmatprep.subr.bf16.mxu0 %v398
    %605 = vmatpush1.bf16.msra.mxu0 %v397
    %606 = vmatprep.subr.bf16.mxu0 %v400
    %607 = vmatpush1.bf16.msra.mxu0 %v399
    %608 = vmatprep.subr.bf16.mxu0 %v402
    %609 = vmatpush1.bf16.msra.mxu0 %v401
    %610 = vmatprep.subr.bf16.mxu0 %v404
    %611 = vmatpush1.bf16.msra.mxu0 %v403
    %612 = vmatprep.subr.bf16.mxu0 %v406
    %613 = vmatpush1.bf16.msra.mxu0 %v405
    %614 = vmatprep.subr.bf16.mxu0 %v408
    %615 = vmatpush1.bf16.msra.mxu0 %v407
    %616 = vmatprep.subr.bf16.mxu0 %v410
    %617 = vmatpush1.bf16.msra.mxu0 %v409
    %618 = vmatprep.subr.bf16.mxu0 %v412
    %619 = vmatpush1.bf16.msra.mxu0 %v411
    %620 = vmatprep.mubr.bf16.mxu0 %v526
    %621 = vmatmul.mubr.bf16.gmra.mrb[0].mxu0 %v524
    %v622 = vpop.f32.mrb[0].mxu0
    %v623 = vadd.f32 %v582, %v622
    %v624 = vpop.f32.mrb[0].mxu0
    %v625 = vadd.f32 %v584, %v624
    %v626 = vpop.f32.mrb[0].mxu0
    %v627 = vpop.f32.mrb[0].mxu0
    %628 = vdwg.mxu0
    %629 = vmatprep.subr.bf16.mxu0 %v414
    %630 = vmatpush1.bf16.msra.mxu0 %v413
    %631 = vmatprep.subr.bf16.mxu0 %v416
    %632 = vmatpush1.bf16.msra.mxu0 %v415
    %633 = vmatprep.subr.bf16.mxu0 %v418
    %634 = vmatpush1.bf16.msra.mxu0 %v417
    %635 = vmatprep.subr.bf16.mxu0 %v420
    %636 = vmatpush1.bf16.msra.mxu0 %v419
    %637 = vmatprep.subr.bf16.mxu0 %v422
    %638 = vmatpush1.bf16.msra.mxu0 %v421
    %639 = vmatprep.subr.bf16.mxu0 %v424
    %640 = vmatpush1.bf16.msra.mxu0 %v423
    %641 = vmatprep.subr.bf16.mxu0 %v426
    %642 = vmatpush1.bf16.msra.mxu0 %v425
    %643 = vmatprep.subr.bf16.mxu0 %v428
    %644 = vmatpush1.bf16.msra.mxu0 %v427
    %645 = vmatprep.subr.bf16.mxu0 %v430
    %646 = vmatpush1.bf16.msra.mxu0 %v429
    %647 = vmatprep.subr.bf16.mxu0 %v432
    %648 = vmatpush1.bf16.msra.mxu0 %v431
    %649 = vmatprep.subr.bf16.mxu0 %v434
    %650 = vmatpush1.bf16.msra.mxu0 %v433
    %651 = vmatprep.subr.bf16.mxu0 %v436
    %652 = vmatpush1.bf16.msra.mxu0 %v435
    %653 = vmatprep.subr.bf16.mxu0 %v438
    %654 = vmatpush1.bf16.msra.mxu0 %v437
    %655 = vmatprep.subr.bf16.mxu0 %v440
    %656 = vmatpush1.bf16.msra.mxu0 %v439
    %657 = vmatprep.subr.bf16.mxu0 %v442
    %658 = vmatpush1.bf16.msra.mxu0 %v441
    %659 = vmatprep.subr.bf16.mxu0 %v444
    %660 = vmatpush1.bf16.msra.mxu0 %v443
    %661 = vmatprep.mubr.bf16.mxu0 %v523
    %662 = vmatmul.mubr.bf16.gmra.mrb[0].mxu0 %v509
    %v663 = vpop.f32.mrb[0].mxu0
    %v664 = vadd.f32 %v623, %v663
    %v665 = vpop.f32.mrb[0].mxu0
    %v666 = vadd.f32 %v625, %v665
    %v667 = vpop.f32.mrb[0].mxu0
    %v668 = vpop.f32.mrb[0].mxu0
    %669 = vdwg.mxu0
    %670 = vmatprep.subr.bf16.mxu0 %v446
    %671 = vmatpush1.bf16.msra.mxu0 %v445
    %672 = vmatprep.subr.bf16.mxu0 %v448
    %673 = vmatpush1.bf16.msra.mxu0 %v447
    %674 = vmatprep.subr.bf16.mxu0 %v450
    %675 = vmatpush1.bf16.msra.mxu0 %v449
    %676 = vmatprep.subr.bf16.mxu0 %v452
    %677 = vmatpush1.bf16.msra.mxu0 %v451
    %678 = vmatprep.subr.bf16.mxu0 %v454
    %679 = vmatpush1.bf16.msra.mxu0 %v453
    %680 = vmatprep.subr.bf16.mxu0 %v456
    %681 = vmatpush1.bf16.msra.mxu0 %v455
    %682 = vmatprep.subr.bf16.mxu0 %v458
    %683 = vmatpush1.bf16.msra.mxu0 %v457
    %684 = vmatprep.subr.bf16.mxu0 %v460
    %685 = vmatpush1.bf16.msra.mxu0 %v459
    %686 = vmatprep.subr.bf16.mxu0 %v462
    %687 = vmatpush1.bf16.msra.mxu0 %v461
    %688 = vmatprep.subr.bf16.mxu0 %v464
    %689 = vmatpush1.bf16.msra.mxu0 %v463
    %690 = vmatprep.subr.bf16.mxu0 %v466
    %691 = vmatpush1.bf16.msra.mxu0 %v465
    %692 = vmatprep.subr.bf16.mxu0 %v468
    %693 = vmatpush1.bf16.msra.mxu0 %v467
    %694 = vmatprep.subr.bf16.mxu0 %v470
    %695 = vmatpush1.bf16.msra.mxu0 %v469
    %696 = vmatprep.subr.bf16.mxu0 %v472
    %697 = vmatpush1.bf16.msra.mxu0 %v471
    %698 = vmatprep.subr.bf16.mxu0 %v474
    %699 = vmatpush1.bf16.msra.mxu0 %v473
    %700 = vmatprep.subr.bf16.mxu0 %v476
    %701 = vmatpush1.bf16.msra.mxu0 %v475
    %702 = vmatprep.mubr.bf16.mxu0 %v527
    %703 = vmatmul.mubr.bf16.gmra.mrb[0].mxu0 %v525
    %v704 = vpop.f32.mrb[0].mxu0
    %v705 = vadd.f32 %v664, %v704
    %v706 = vpop.f32.mrb[0].mxu0
    %v707 = vadd.f32 %v666, %v706
    %v708 = vpop.f32.mrb[0].mxu0
    %v709 = vpop.f32.mrb[0].mxu0
    %710 = vdwg.mxu0
    %v711 = vmax.f32 %v705, 0.0
    %v712 = vmax.f32 %v707, 0.0
    %v713 = vpack.c.bf16 %v711, %v711
    %v714 = vpack.c.bf16 %v712, %v712
    %v715 = vld [vmem:[#allocation5] sm:$0xff]
    %v716 = vld [vmem:[#allocation5 + $0x8] sm:$0xff]
    %v717 = vld [vmem:[#allocation5 + $0x10] sm:$0xff]
    %v718 = vld [vmem:[#allocation5 + $0x18] sm:$0xff]
    %v719 = vld [vmem:[#allocation5 + $0x20] sm:$0xff]
    %v720 = vld [vmem:[#allocation5 + $0x28] sm:$0xff]
    %v721 = vld [vmem:[#allocation5 + $0x30] sm:$0xff]
    %v722 = vld [vmem:[#allocation5 + $0x38] sm:$0xff]
    %v723 = vld [vmem:[#allocation5 + $0x40] sm:$0xff]
    %v724 = vld [vmem:[#allocation5 + $0x48] sm:$0xff]
    %v725 = vld [vmem:[#allocation5 + $0x50] sm:$0xff]
    %v726 = vld [vmem:[#allocation5 + $0x58] sm:$0xff]
    %v727 = vld [vmem:[#allocation5 + $0x60] sm:$0xff]
    %v728 = vld [vmem:[#allocation5 + $0x68] sm:$0xff]
    %v729 = vld [vmem:[#allocation5 + $0x70] sm:$0xff]
    %v730 = vld [vmem:[#allocation5 + $0x78] sm:$0xff]
    %v731 = vld [vmem:[#allocation5 + $0x80] sm:$0xff]
    %v732 = vld [vmem:[#allocation5 + $0x88] sm:$0xff]
    %v733 = vld [vmem:[#allocation5 + $0x90] sm:$0xff]
    %v734 = vld [vmem:[#allocation5 + $0x98] sm:$0xff]
    %v735 = vld [vmem:[#allocation5 + $0xa0] sm:$0xff]
    %v736 = vld [vmem:[#allocation5 + $0xa8] sm:$0xff]
    %v737 = vld [vmem:[#allocation5 + $0xb0] sm:$0xff]
    %v738 = vld [vmem:[#allocation5 + $0xb8] sm:$0xff]
    %v739 = vld [vmem:[#allocation5 + $0xc0] sm:$0xff]
    %v740 = vld [vmem:[#allocation5 + $0xc8] sm:$0xff]
    %v741 = vld [vmem:[#allocation5 + $0xd0] sm:$0xff]
    %v742 = vld [vmem:[#allocation5 + $0xd8] sm:$0xff]
    %v743 = vld [vmem:[#allocation5 + $0xe0] sm:$0xff]
    %v744 = vld [vmem:[#allocation5 + $0xe8] sm:$0xff]
    %v745 = vld [vmem:[#allocation5 + $0xf0] sm:$0xff]
    %v746 = vld [vmem:[#allocation5 + $0xf8] sm:$0xff]
    %v747 = vld [vmem:[%s5] sm:$0x3]
    %v780 = vunpack.c.l.b16 %v715
    %v781 = vunpack.c.h.b16 %v715
    %v782 = vunpack.c.l.b16 %v716
    %v783 = vunpack.c.h.b16 %v716
    %v784 = vunpack.c.l.b16 %v717
    %v785 = vunpack.c.h.b16 %v717
    %v786 = vunpack.c.l.b16 %v718
    %v787 = vunpack.c.h.b16 %v718
    %v788 = vunpack.c.l.b16 %v719
    %v789 = vunpack.c.h.b16 %v719
    %v790 = vunpack.c.l.b16 %v720
    %v791 = vunpack.c.h.b16 %v720
    %v792 = vunpack.c.l.b16 %v721
    %v793 = vunpack.c.h.b16 %v721
    %v794 = vunpack.c.l.b16 %v722
    %v795 = vunpack.c.h.b16 %v722
    %v796 = vunpack.c.l.b16 %v723
    %v797 = vunpack.c.h.b16 %v723
    %v798 = vunpack.c.l.b16 %v724
    %v799 = vunpack.c.h.b16 %v724
    %v800 = vunpack.c.l.b16 %v725
    %v801 = vunpack.c.h.b16 %v725
    %v802 = vunpack.c.l.b16 %v726
    %v803 = vunpack.c.h.b16 %v726
    %v804 = vunpack.c.l.b16 %v727
    %v805 = vunpack.c.h.b16 %v727
    %v806 = vunpack.c.l.b16 %v728
    %v807 = vunpack.c.h.b16 %v728
    %v808 = vunpack.c.l.b16 %v729
    %v809 = vunpack.c.h.b16 %v729
    %v810 = vunpack.c.l.b16 %v730
    %v811 = vunpack.c.h.b16 %v730
    %v812 = vunpack.c.l.b16 %v731
    %v813 = vunpack.c.h.b16 %v731
    %v814 = vunpack.c.l.b16 %v732
    %v815 = vunpack.c.h.b16 %v732
    %v816 = vunpack.c.l.b16 %v733
    %v817 = vunpack.c.h.b16 %v733
    %v818 = vunpack.c.l.b16 %v734
    %v819 = vunpack.c.h.b16 %v734
    %v820 = vunpack.c.l.b16 %v735
    %v821 = vunpack.c.h.b16 %v735
    %v822 = vunpack.c.l.b16 %v736
    %v823 = vunpack.c.h.b16 %v736
    %v824 = vunpack.c.l.b16 %v737
    %v825 = vunpack.c.h.b16 %v737
    %v826 = vunpack.c.l.b16 %v738
    %v827 = vunpack.c.h.b16 %v738
    %v828 = vunpack.c.l.b16 %v739
    %v829 = vunpack.c.h.b16 %v739
    %v830 = vunpack.c.l.b16 %v740
    %v831 = vunpack.c.h.b16 %v740
    %v832 = vunpack.c.l.b16 %v741
    %v833 = vunpack.c.h.b16 %v741
    %v834 = vunpack.c.l.b16 %v742
    %v835 = vunpack.c.h.b16 %v742
    %v836 = vunpack.c.l.b16 %v743
    %v837 = vunpack.c.h.b16 %v743
    %v838 = vunpack.c.l.b16 %v744
    %v839 = vunpack.c.h.b16 %v744
    %v840 = vunpack.c.l.b16 %v745
    %v841 = vunpack.c.h.b16 %v745
    %v842 = vunpack.c.l.b16 %v746
    %v843 = vunpack.c.h.b16 %v746
    %v844 = vpack.c.b16 %v782, %v780
    %v845 = vpack.c.b16 %v783, %v781
    %v846 = vpack.c.b16 %v786, %v784
    %v847 = vpack.c.b16 %v787, %v785
    %v848 = vpack.c.b16 %v790, %v788
    %v849 = vpack.c.b16 %v791, %v789
    %v850 = vpack.c.b16 %v794, %v792
    %v851 = vpack.c.b16 %v795, %v793
    %v852 = vpack.c.b16 %v798, %v796
    %v853 = vpack.c.b16 %v799, %v797
    %v854 = vpack.c.b16 %v802, %v800
    %v855 = vpack.c.b16 %v803, %v801
    %v856 = vpack.c.b16 %v806, %v804
    %v857 = vpack.c.b16 %v807, %v805
    %v858 = vpack.c.b16 %v810, %v808
    %v859 = vpack.c.b16 %v811, %v809
    %v860 = vpack.c.b16 %v814, %v812
    %v861 = vpack.c.b16 %v815, %v813
    %v862 = vpack.c.b16 %v818, %v816
    %v863 = vpack.c.b16 %v819, %v817
    %v864 = vpack.c.b16 %v822, %v820
    %v865 = vpack.c.b16 %v823, %v821
    %v866 = vpack.c.b16 %v826, %v824
    %v867 = vpack.c.b16 %v827, %v825
    %v868 = vpack.c.b16 %v830, %v828
    %v869 = vpack.c.b16 %v831, %v829
    %v870 = vpack.c.b16 %v834, %v832
    %v871 = vpack.c.b16 %v835, %v833
    %v872 = vpack.c.b16 %v838, %v836
    %v873 = vpack.c.b16 %v839, %v837
    %v874 = vpack.c.b16 %v842, %v840
    %v875 = vpack.c.b16 %v843, %v841
    %v909 = vlaneseq
    %v910 = vshrl.u32 %v909, 7
    %v911 = vsub.s32 0, %v910
    %v912 = vrot.slane %v747, %v911
    %v913 = vlaneseq
    %v914 = vshrl.u32 %v913, 7
    %v915 = vsub.s32 1, %v914
    %v916 = vrot.slane %v747, %v915
    %919 = vmatprep.subr.bf16.mxu0 %v845
    %920 = vmatpush1.bf16.msra.mxu0 %v844
    %921 = vmatprep.subr.bf16.mxu0 %v847
    %922 = vmatpush1.bf16.msra.mxu0 %v846
    %923 = vmatprep.subr.bf16.mxu0 %v849
    %924 = vmatpush1.bf16.msra.mxu0 %v848
    %925 = vmatprep.subr.bf16.mxu0 %v851
    %926 = vmatpush1.bf16.msra.mxu0 %v850
    %927 = vmatprep.subr.bf16.mxu0 %v853
    %928 = vmatpush1.bf16.msra.mxu0 %v852
    %929 = vmatprep.subr.bf16.mxu0 %v855
    %930 = vmatpush1.bf16.msra.mxu0 %v854
    %931 = vmatprep.subr.bf16.mxu0 %v857
    %932 = vmatpush1.bf16.msra.mxu0 %v856
    %933 = vmatprep.subr.bf16.mxu0 %v859
    %934 = vmatpush1.bf16.msra.mxu0 %v858
    %935 = vmatprep.subr.bf16.mxu0 %v861
    %936 = vmatpush1.bf16.msra.mxu0 %v860
    %937 = vmatprep.subr.bf16.mxu0 %v863
    %938 = vmatpush1.bf16.msra.mxu0 %v862
    %939 = vmatprep.subr.bf16.mxu0 %v865
    %940 = vmatpush1.bf16.msra.mxu0 %v864
    %941 = vmatprep.subr.bf16.mxu0 %v867
    %942 = vmatpush1.bf16.msra.mxu0 %v866
    %943 = vmatprep.subr.bf16.mxu0 %v869
    %944 = vmatpush1.bf16.msra.mxu0 %v868
    %945 = vmatprep.subr.bf16.mxu0 %v871
    %946 = vmatpush1.bf16.msra.mxu0 %v870
    %947 = vmatprep.subr.bf16.mxu0 %v873
    %948 = vmatpush1.bf16.msra.mxu0 %v872
    %949 = vmatprep.subr.bf16.mxu0 %v875
    %950 = vmatpush1.bf16.msra.mxu0 %v874
    %951 = vmatprep.mubr.bf16.mxu0 %v714
    %952 = vmatmul.mubr.bf16.gmra.mrb[0].mxu0 %v713
    %v953 = vpop.f32.mrb[0].mxu0
    %v954 = vadd.f32 %v912, %v953
    %v955 = vpop.f32.mrb[0].mxu0
    %v956 = vadd.f32 %v916, %v955
    %v957 = vpop.f32.mrb[0].mxu0
    %v958 = vpop.f32.mrb[0].mxu0
    %959 = vdwg.mxu0
    %v960 = vmax.f32 %v954, 0.0
    %v961 = vmax.f32 %v956, 0.0
    %v962 = vpack.c.bf16 %v960, %v960
    %v963 = vpack.c.bf16 %v961, %v961
    %v964 = vld [vmem:[#allocation8] sm:$0xf]
    %v965 = vld [vmem:[#allocation8 + $0x4] sm:$0xf]
    %v966 = vld [vmem:[#allocation8 + $0x8] sm:$0xf]
    %v967 = vld [vmem:[#allocation8 + $0xc] sm:$0xf]
    %v968 = vld [vmem:[#allocation8 + $0x10] sm:$0xf]
    %v969 = vld [vmem:[#allocation8 + $0x14] sm:$0xf]
    %v970 = vld [vmem:[#allocation8 + $0x18] sm:$0xf]
    %v971 = vld [vmem:[#allocation8 + $0x1c] sm:$0xf]
    %v972 = vld [vmem:[#allocation8 + $0x20] sm:$0xf]
    %v973 = vld [vmem:[#allocation8 + $0x24] sm:$0xf]
    %v974 = vld [vmem:[#allocation8 + $0x28] sm:$0xf]
    %v975 = vld [vmem:[#allocation8 + $0x2c] sm:$0xf]
    %v976 = vld [vmem:[#allocation8 + $0x30] sm:$0xf]
    %v977 = vld [vmem:[#allocation8 + $0x34] sm:$0xf]
    %v978 = vld [vmem:[#allocation8 + $0x38] sm:$0xf]
    %v979 = vld [vmem:[#allocation8 + $0x3c] sm:$0xf]
    %v980 = vld [vmem:[#allocation8 + $0x40] sm:$0xf]
    %v981 = vld [vmem:[#allocation8 + $0x44] sm:$0xf]
    %v982 = vld [vmem:[#allocation8 + $0x48] sm:$0xf]
    %v983 = vld [vmem:[#allocation8 + $0x4c] sm:$0xf]
    %v984 = vld [vmem:[#allocation8 + $0x50] sm:$0xf]
    %v985 = vld [vmem:[#allocation8 + $0x54] sm:$0xf]
    %v986 = vld [vmem:[#allocation8 + $0x58] sm:$0xf]
    %v987 = vld [vmem:[#allocation8 + $0x5c] sm:$0xf]
    %v988 = vld [vmem:[#allocation8 + $0x60] sm:$0xf]
    %v989 = vld [vmem:[#allocation8 + $0x64] sm:$0xf]
    %v990 = vld [vmem:[#allocation8 + $0x68] sm:$0xf]
    %v991 = vld [vmem:[#allocation8 + $0x6c] sm:$0xf]
    %v992 = vld [vmem:[#allocation8 + $0x70] sm:$0xf]
    %v993 = vld [vmem:[#allocation8 + $0x74] sm:$0xf]
    %v994 = vld [vmem:[#allocation8 + $0x78] sm:$0xf]
    %v995 = vld [vmem:[#allocation8 + $0x7c] sm:$0xf]
    %v996 = vld [vmem:[%s7] sm:$0x1]
    %v1029 = vunpack.c.l.b16 %v964
    %v1030 = vunpack.c.l.b16 %v965
    %v1031 = vunpack.c.l.b16 %v966
    %v1032 = vunpack.c.l.b16 %v967
    %v1033 = vunpack.c.l.b16 %v968
    %v1034 = vunpack.c.l.b16 %v969
    %v1035 = vunpack.c.l.b16 %v970
    %v1036 = vunpack.c.l.b16 %v971
    %v1037 = vunpack.c.l.b16 %v972
    %v1038 = vunpack.c.l.b16 %v973
    %v1039 = vunpack.c.l.b16 %v974
    %v1040 = vunpack.c.l.b16 %v975
    %v1041 = vunpack.c.l.b16 %v976
    %v1042 = vunpack.c.l.b16 %v977
    %v1043 = vunpack.c.l.b16 %v978
    %v1044 = vunpack.c.l.b16 %v979
    %v1045 = vunpack.c.l.b16 %v980
    %v1046 = vunpack.c.l.b16 %v981
    %v1047 = vunpack.c.l.b16 %v982
    %v1048 = vunpack.c.l.b16 %v983
    %v1049 = vunpack.c.l.b16 %v984
    %v1050 = vunpack.c.l.b16 %v985
    %v1051 = vunpack.c.l.b16 %v986
    %v1052 = vunpack.c.l.b16 %v987
    %v1053 = vunpack.c.l.b16 %v988
    %v1054 = vunpack.c.l.b16 %v989
    %v1055 = vunpack.c.l.b16 %v990
    %v1056 = vunpack.c.l.b16 %v991
    %v1057 = vunpack.c.l.b16 %v992
    %v1058 = vunpack.c.l.b16 %v993
    %v1059 = vunpack.c.l.b16 %v994
    %v1060 = vunpack.c.l.b16 %v995
    %v1061 = vpack.c.b16 %v1030, %v1029
    %v1062 = vpack.c.b16 %v1032, %v1031
    %v1063 = vpack.c.b16 %v1034, %v1033
    %v1064 = vpack.c.b16 %v1036, %v1035
    %v1065 = vpack.c.b16 %v1038, %v1037
    %v1066 = vpack.c.b16 %v1040, %v1039
    %v1067 = vpack.c.b16 %v1042, %v1041
    %v1068 = vpack.c.b16 %v1044, %v1043
    %v1069 = vpack.c.b16 %v1046, %v1045
    %v1070 = vpack.c.b16 %v1048, %v1047
    %v1071 = vpack.c.b16 %v1050, %v1049
    %v1072 = vpack.c.b16 %v1052, %v1051
    %v1073 = vpack.c.b16 %v1054, %v1053
    %v1074 = vpack.c.b16 %v1056, %v1055
    %v1075 = vpack.c.b16 %v1058, %v1057
    %v1076 = vpack.c.b16 %v1060, %v1059
    %1093 = vmatprep.subr.bf16.mxu0 0
    %1094 = vmatpush1.bf16.msra.mxu0 %v1061
    %1095 = vmatprep.subr.bf16.mxu0 0
    %1096 = vmatpush1.bf16.msra.mxu0 %v1062
    %1097 = vmatprep.subr.bf16.mxu0 0
    %1098 = vmatpush1.bf16.msra.mxu0 %v1063
    %1099 = vmatprep.subr.bf16.mxu0 0
    %1100 = vmatpush1.bf16.msra.mxu0 %v1064
    %1101 = vmatprep.subr.bf16.mxu0 0
    %1102 = vmatpush1.bf16.msra.mxu0 %v1065
    %1103 = vmatprep.subr.bf16.mxu0 0
    %1104 = vmatpush1.bf16.msra.mxu0 %v1066
    %1105 = vmatprep.subr.bf16.mxu0 0
    %1106 = vmatpush1.bf16.msra.mxu0 %v1067
    %1107 = vmatprep.subr.bf16.mxu0 0
    %1108 = vmatpush1.bf16.msra.mxu0 %v1068
    %1109 = vmatprep.subr.bf16.mxu0 0
    %1110 = vmatpush1.bf16.msra.mxu0 %v1069
    %1111 = vmatprep.subr.bf16.mxu0 0
    %1112 = vmatpush1.bf16.msra.mxu0 %v1070
    %1113 = vmatprep.subr.bf16.mxu0 0
    %1114 = vmatpush1.bf16.msra.mxu0 %v1071
    %1115 = vmatprep.subr.bf16.mxu0 0
    %1116 = vmatpush1.bf16.msra.mxu0 %v1072
    %1117 = vmatprep.subr.bf16.mxu0 0
    %1118 = vmatpush1.bf16.msra.mxu0 %v1073
    %1119 = vmatprep.subr.bf16.mxu0 0
    %1120 = vmatpush1.bf16.msra.mxu0 %v1074
    %1121 = vmatprep.subr.bf16.mxu0 0
    %1122 = vmatpush1.bf16.msra.mxu0 %v1075
    %1123 = vmatprep.subr.bf16.mxu0 0
    %1124 = vmatpush1.bf16.msra.mxu0 %v1076
    %1125 = vmatprep.mubr.bf16.mxu0 %v963
    %1126 = vmatmul.mubr.bf16.gmra.mrb[0].mxu0 %v962
    %v1127 = vpop.f32.mrb[0].mxu0
    %v1128 = vadd.f32 %v996, %v1127
    %v1129 = vpop.f32.mrb[0].mxu0
    %v1130 = vpop.f32.mrb[0].mxu0
    %v1131 = vpop.f32.mrb[0].mxu0
    %1132 = vdwg.mxu0
    %1133 = vst [vmem:[#allocation10] sm:$0x1] %v1128
    // Predicated region
    $region38: #{cnn_forward.1} parent=1 // pred_check
      _
    $region39: #{cnn_forward.1} parent=1 // pred_check_branch
      %1135 = sbr.rel (0) target = $region41
    $region40: #{cnn_forward.1} parent=1 // pred_region
      %s1137 = ssub.s32 16, 16
      %1138 = vsyncadd [#allocation7], %s1137
      %s1140 = sshll.u32 [#allocation10], 4
      %s1141 = int_to_ptr.vmem [resolvable:$true] %s1140
      %1143 = dma.vmem_to_hbm [thread:$0]  %s1141, 16, %s8, [#allocation7]
    $region41: #{cnn_forward.1} parent=1 // pred_fallthru
      _
    // Predicated region
    $region42: #{cnn_forward.1} parent=1 // pred_check
      _
    $region43: #{cnn_forward.1} parent=1 // pred_check_branch
      %1145 = sbr.rel (0) target = $region45
    $region44: #{cnn_forward.1} parent=1 // pred_region
      %1146 = dma.done [#allocation7], 16
    $region45: #{cnn_forward.1} parent=1 // pred_fallthru
      _
    %1147 = vsyncpa [#allocation6], 1
    %1148 = vsyncpa [#allocation9], 1
    %1149 = vsyncpa [#allocation7], 1
  %1150 = vsyncmov [#allocation4]
  %s1151 = vpop.sfrf %1150
  %p1152 = scmp.eq.s32.totalorder %s1151, 0
  %p1153 = pneg %p1152
  %1155 = shalt.err (%p1153)

</llo_original>
